<compile_context>
chip_gen: v7x
topology: tpu7x:2x2x1
jax: 0.10.0
libtpu: 0.0.40
codegen_flags: <defaults>
</compile_context>

<pallas_src>
import jax
import jax.numpy as jnp
from jax.experimental import pallas as pl
from jax.experimental.pallas import tpu as pltpu


def _copy_kernel(x_ref, o_ref):
    # Pure identity materialization of one (tr, tc) tile.
    o_ref[...] = x_ref[...]


# Sublane packing multiple per dtype width (f32: 8, bf16: 16, int8/fp8: 32).
_SUBLANE_MULT = {4: 8, 2: 16, 1: 32}

# Per-block byte budget.  BlockSpec double-buffers both the input and the
# output tile, so live VMEM footprint is ~4x this: 4 MiB -> ~16 MiB, which
# fits the default scoped-VMEM limit on every generation (16 MiB v5e,
# 32 MiB v6e / v7x) while keeping the copy near the HBM roofline.
_BLOCK_BUDGET_BYTES = 4 * 1024 * 1024
_VMEM_LIMIT_BYTES = 32 * 1024 * 1024


def _materialize_copy_2d(x2d: jax.Array) -> jax.Array:
    """Tiled identity copy of a 2-D array with lane-dense, large blocks."""
    rows, cols = x2d.shape
    itemsize = jnp.dtype(x2d.dtype).itemsize
    sub = _SUBLANE_MULT.get(itemsize, 8)
    row_bytes = cols * itemsize

    if sub * row_bytes <= _BLOCK_BUDGET_BYTES:
        # Preferred path: each block spans the FULL column extent (lane-dense
        # unmasked stores), 1-D grid over rows.  Row tile is the largest
        # dtype-aware sublane multiple that fits the block budget.
        if rows <= sub:
            tr = rows                      # full extent — always legal
        else:
            max_tr = max(sub, (_BLOCK_BUDGET_BYTES // row_bytes) // sub * sub)
            tr = rows if rows <= max_tr else max_tr
        grid = (pl.cdiv(rows, tr),)
        in_spec = pl.BlockSpec((tr, cols), lambda i: (i, 0))
        out_spec = pl.BlockSpec((tr, cols), lambda i: (i, 0))
        semantics = ("parallel",)
    else:
        # Fallback for very wide rows: keep the row tile at one sublane
        # multiple and tile columns in a large multiple of 128 lanes.
        tr = rows if rows < sub else sub
        max_tc = max(128, (_BLOCK_BUDGET_BYTES // (tr * itemsize)) // 128 * 128)
        tc = cols if cols <= max_tc else max_tc
        grid = (pl.cdiv(rows, tr), pl.cdiv(cols, tc))
        in_spec = pl.BlockSpec((tr, tc), lambda i, j: (i, j))
        out_spec = pl.BlockSpec((tr, tc), lambda i, j: (i, j))
        semantics = ("parallel", "parallel")

    return pl.pallas_call(
        _copy_kernel,
        out_shape=jax.ShapeDtypeStruct((rows, cols), x2d.dtype),
        grid_spec=pltpu.PrefetchScalarGridSpec(
            num_scalar_prefetch=0,
            grid=grid,
            in_specs=[in_spec],
            out_specs=out_spec,
        ),
        # Output aliases the input: no second full-size HBM buffer when the
        # input can be donated; harmless (defensive copy) otherwise.
        input_output_aliases={0: 0},
        compiler_params=pltpu.CompilerParams(
            dimension_semantics=semantics,
            vmem_limit_bytes=_VMEM_LIMIT_BYTES,
        ),
    )(x2d)


def merge_temporal_dim(x_seq: jax.Array, *, materialize: bool = False) -> jax.Array:
    """Pallas/JAX equivalent of MergeTemporalDim.forward.

    x_seq: (T, B, *rest) -> (T*B, *rest).

    Default path is a pure metadata reshape (flatten(0,1) of a contiguous
    array reorders nothing), which XLA treats as a free view — the optimal
    implementation for this op.  Set materialize=True to force an explicit
    Pallas copy (identity materialization) instead.
    """
    T, B = x_seq.shape[0], x_seq.shape[1]
    tail = x_seq.shape[2:]
    rows = T * B

    if not materialize:
        return x_seq.reshape((rows,) + tail)

    cols = 1
    for d in tail:
        cols *= int(d)
    x2d = x_seq.reshape(rows, cols)
    out2d = _materialize_copy_2d(x2d)
    return out2d.reshape((rows,) + tail)


if __name__ == "__main__":
    key = jax.random.PRNGKey(0)

    # Test 1: f32, T=4, B=2, C=4, H=16, W=16 — exercises the Pallas copy path.
    T, B, C, H, W = 4, 2, 4, 16, 16
    k1, k2 = jax.random.split(key)
    x_seq = jax.random.normal(k1, (T, B, C, H, W), dtype=jnp.float32)

    out_kernel = jax.block_until_ready(merge_temporal_dim(x_seq, materialize=True))
    out_fast = jax.block_until_ready(merge_temporal_dim(x_seq))
    ref = x_seq.reshape(T * B, C, H, W)

    assert out_kernel.shape == (T * B, C, H, W)
    assert out_kernel.dtype == x_seq.dtype
    assert bool(jnp.array_equal(out_kernel, ref))
    assert bool(jnp.array_equal(out_fast, ref))

    # Test 2: bf16 (16-row sublane packing path), T=4, B=4, C=4, H=16, W=16.
    Tb, Bb = 4, 4
    x_bf16 = jax.random.normal(k2, (Tb, Bb, C, H, W), dtype=jnp.bfloat16)
    out_bf16 = jax.block_until_ready(merge_temporal_dim(x_bf16, materialize=True))
    ref_bf16 = x_bf16.reshape(Tb * Bb, C, H, W)
    assert out_bf16.shape == (Tb * Bb, C, H, W)
    assert out_bf16.dtype == x_bf16.dtype
    assert bool(jnp.array_equal(out_bf16, ref_bf16))

    print("KERNEL_OK")
</pallas_src>

<mosaic_0001>
module attributes {stable_mosaic.version = 11 : i64} {
  func.func @_copy_kernel(%arg0: i32, %arg1: memref<8x1024xf32, #tpu.memory_space<vmem>>, %arg2: memref<8x1024xf32, #tpu.memory_space<vmem>>) attributes {dimension_semantics = [#tpu.dimension_semantics<parallel>], iteration_bounds = array<i64: 1>, scalar_prefetch = 0 : i64, scratch_operands = 0 : i64, tpu.core_type = #tpu.core_type<tc>, window_params = [{transform_indices = @transform_0, window_bounds = array<i64: 8, 1024>}, {transform_indices = @transform_1, window_bounds = array<i64: 8, 1024>}]} {
    %c0 = arith.constant 0 : index
    %c0_0 = arith.constant 0 : index
    %0 = vector.load %arg1[%c0, %c0_0] : memref<8x1024xf32, #tpu.memory_space<vmem>>, vector<8x1024xf32>
    %c0_1 = arith.constant 0 : index
    %c0_2 = arith.constant 0 : index
    %1 = vector.load %arg2[%c0_1, %c0_2] : memref<8x1024xf32, #tpu.memory_space<vmem>>, vector<8x1024xf32>
    tpu.vector_store %arg2[%c0_1, %c0_2], %0 {strides = array<i32>} : memref<8x1024xf32, #tpu.memory_space<vmem>>, vector<8x1024xf32>,
    return
  }
  func.func @transform_0(%arg0: i32) -> (i32, i32) {
    %c0_i32 = arith.constant 0 : i32
    %c0_i32_0 = arith.constant 0 : i32
    return %arg0, %c0_i32 : i32, i32
  }
  func.func @transform_1(%arg0: i32) -> (i32, i32) {
    %c0_i32 = arith.constant 0 : i32
    %c0_i32_0 = arith.constant 0 : i32
    return %arg0, %c0_i32 : i32, i32
  }
}

</mosaic_0001>

<llo_original>
// kernel: tpu_custom_call.1
$region0: #{tpu_custom_call.1}
  #allocation0 [shape = 'u32[]', space=smem, size = 0x4, offset = 0x4, fixed_abs, tag = 'smem constant byte address 0x4 - core index']
  #allocation1 [shape = 'u32[144,128]{1,0:T(1,128)}', space=vmem, size = 0x12000, scoped, tag = 'internal scratch']
  %s0 = inlined_call_operand.hbm [shape: f32[8,1024], index: 0, kind: input, shape index: {}, may-alias: {0,1}]
  %s1 = inlined_call_operand.hbm [shape: f32[8,1024], index: 1, kind: output, shape index: {}, may-alias: {0,1}]
  %s2 = sld [smem:[#allocation0]]
  $region18: #{tpu_custom_call.1} parent=0
    _
  %s4 = ssub.s32 1, %s2
  %s5 = scalar_select 0, %s4, %s2
  $region1: #{tpu_custom_call.1} parent=0
    #allocation2 [shape = 'u8[32768]{0}', space=vmem, size = 0x8000, scoped, tag = 'input window, operand 0, single buffered']
    #allocation3 [shape = 's32[1]{0}', space=sflag, size = 0x4, scoped, tag = 'scoped memory for tpu_custom_call.1']
    #allocation4 [shape = 's32[1]{0}', space=sflag, size = 0x4, scoped, tag = 'scoped memory for tpu_custom_call.1']
    #allocation5 [shape = 'u8[32768]{0}', space=vmem, size = 0x8000, scoped, tag = 'output window, operand 0, single buffered']
    %6 = vsyncpa [#allocation3], 0
    %7 = vsyncpa [#allocation4], 0
    // Predicated region
    $region2: #{tpu_custom_call.1} parent=1 // pred_check
      _
    $region3: #{tpu_custom_call.1} parent=1 // pred_check_branch
      %9 = sbr.rel (0) target = $region5
    $region4: #{tpu_custom_call.1} parent=1 // pred_region
      %s11 = ssub.s32 1024, 1024
      %12 = vsyncadd [#allocation3], %s11
      %s14 = sshll.u32 [#allocation2], 4
      %s15 = int_to_ptr.vmem [resolvable:$true] %s14
      %17 = dma.hbm_to_vmem [thread:$0]  %s0, 1024, %s15, [#allocation3]
    $region5: #{tpu_custom_call.1} parent=1 // pred_fallthru
      _
    // Predicated region
    $region6: #{tpu_custom_call.1} parent=1 // pred_check
      _
    $region7: #{tpu_custom_call.1} parent=1 // pred_check_branch
      %19 = sbr.rel (0) target = $region9
    $region8: #{tpu_custom_call.1} parent=1 // pred_region
      %20 = dma.done [#allocation3], 1024
    $region9: #{tpu_custom_call.1} parent=1 // pred_fallthru
      _
    %v21 = vld [vmem:[#allocation2] sm:$0xff]
    %v22 = vld [vmem:[#allocation2 + $0x8] sm:$0xff]
    %v23 = vld [vmem:[#allocation2 + $0x10] sm:$0xff]
    %v24 = vld [vmem:[#allocation2 + $0x18] sm:$0xff]
    %v25 = vld [vmem:[#allocation2 + $0x20] sm:$0xff]
    %v26 = vld [vmem:[#allocation2 + $0x28] sm:$0xff]
    %v27 = vld [vmem:[#allocation2 + $0x30] sm:$0xff]
    %v28 = vld [vmem:[#allocation2 + $0x38] sm:$0xff]
    %29 = vst [vmem:[#allocation5] sm:$0xff] %v21
    %30 = vst [vmem:[#allocation5 + $0x8] sm:$0xff] %v22
    %31 = vst [vmem:[#allocation5 + $0x10] sm:$0xff] %v23
    %32 = vst [vmem:[#allocation5 + $0x18] sm:$0xff] %v24
    %33 = vst [vmem:[#allocation5 + $0x20] sm:$0xff] %v25
    %34 = vst [vmem:[#allocation5 + $0x28] sm:$0xff] %v26
    %35 = vst [vmem:[#allocation5 + $0x30] sm:$0xff] %v27
    %36 = vst [vmem:[#allocation5 + $0x38] sm:$0xff] %v28
    // Predicated region
    $region10: #{tpu_custom_call.1} parent=1 // pred_check
      _
    $region11: #{tpu_custom_call.1} parent=1 // pred_check_branch
      %38 = sbr.rel (0) target = $region13
    $region12: #{tpu_custom_call.1} parent=1 // pred_region
      %s40 = ssub.s32 1024, 1024
      %41 = vsyncadd [#allocation4], %s40
      %s43 = sshll.u32 [#allocation5], 4
      %s44 = int_to_ptr.vmem [resolvable:$true] %s43
      %46 = dma.vmem_to_hbm [thread:$0]  %s44, 1024, %s1, [#allocation4]
    $region13: #{tpu_custom_call.1} parent=1 // pred_fallthru
      _
    // Predicated region
    $region14: #{tpu_custom_call.1} parent=1 // pred_check
      _
    $region15: #{tpu_custom_call.1} parent=1 // pred_check_branch
      %48 = sbr.rel (0) target = $region17
    $region16: #{tpu_custom_call.1} parent=1 // pred_region
      %49 = dma.done [#allocation4], 1024
    $region17: #{tpu_custom_call.1} parent=1 // pred_fallthru
      _
    %50 = vsyncpa [#allocation3], 1
    %51 = vsyncpa [#allocation4], 1

</llo_original>
